<compile_context>
chip_gen: v5e
topology: v5e:2x2
jax: 0.10.0
libtpu: 0.0.40
codegen_flags: <defaults>
</compile_context>

<pallas_src>
import jax
import jax.numpy as jnp
from jax.experimental import pallas as pl
from jax.experimental.pallas import tpu as pltpu


def _round_up(x, m):
    return (x + m - 1) // m * m


def make_mlp_kernel(num_layers, compute_dtype=jnp.bfloat16):
    """Fused MLP: (Linear -> ReLU) * (num_layers - 1) -> Linear, weights in VMEM."""

    def kernel(x_ref, *rest):
        out_ref = rest[-1]
        param_refs = rest[:-1]              # alternating (w_ref, b_ref)
        h = x_ref[...]                      # f32 activation tile [TB, input_dim]
        for i in range(num_layers):
            w = param_refs[2 * i][...]      # bf16 [in, out]
            b = param_refs[2 * i + 1][...]  # f32  [1, out]
            # bf16 x bf16 on the MXU with f32 accumulation; bias/ReLU in f32 (VPU).
            h = jnp.dot(h.astype(compute_dtype), w,
                        preferred_element_type=jnp.float32) + b
            if i < num_layers - 1:
                h = jnp.maximum(h, 0.0)
        out_ref[...] = h.astype(out_ref.dtype)   # unpadded [TB, out_dim] store

    return kernel


def init_params(key, input_dim, output_dim, hidden_layer_dims):
    """nn.Linear-style init U[-1/sqrt(fan_in), +1/sqrt(fan_in)]; weights stored [in, out]."""
    dims = [input_dim] + list(hidden_layer_dims) + [output_dim]
    params = []
    for i in range(len(dims) - 1):
        fan_in, fan_out = dims[i], dims[i + 1]
        key, kw, kb = jax.random.split(key, 3)
        bound = 1.0 / float(jnp.sqrt(jnp.float32(fan_in)))
        w = jax.random.uniform(kw, (fan_in, fan_out), jnp.float32, -bound, bound)
        b = jax.random.uniform(kb, (fan_out,), jnp.float32, -bound, bound)
        params.append((w, b))
    return params


def pack_params(params, weight_dtype=jnp.bfloat16):
    """Cast weights to bf16 once; pad ONLY hidden feature dims to 128 lanes.

    - layer 0 keeps the real input_dim on the contraction axis (no HBM padding of x;
      Mosaic pads the contraction inside vregs).
    - hidden OUTPUT dims are padded to 128 so intermediate activations are lane-aligned;
      padded columns / rows / bias lanes are zero -> valid lanes are exact.
    - the LAST layer keeps the real output_dim so the kernel stores an unpadded result.
    """
    n = len(params)
    packed = []
    for i, (w, b) in enumerate(params):
        in_d, out_d = w.shape
        in_p = in_d if i == 0 else _round_up(in_d, 128)
        out_p = out_d if i == n - 1 else _round_up(out_d, 128)
        w_p = jnp.zeros((in_p, out_p), weight_dtype).at[:in_d, :out_d].set(
            w.astype(weight_dtype))
        b_p = jnp.zeros((1, out_p), jnp.float32).at[0, :out_d].set(b)
        packed.append((w_p, b_p))
    return packed


def _vmem_budget_bytes(tb, in_dim, packed):
    """Resident weights + double-buffered activation tiles, clamped to chip VMEM."""
    def tile_bytes(shape, itemsize):
        r = _round_up(shape[0], 8)
        c = _round_up(shape[1], 128)
        return r * c * itemsize

    out_dim = packed[-1][0].shape[1]
    act = 2 * tile_bytes((tb, in_dim), 4) + 2 * tile_bytes((tb, out_dim), 4)
    wgt = 0
    for w, b in packed:
        # Weights/biases never change block but are still double-buffered by default
        # (trivial bytes here); budget for 2 copies each.
        wgt += 2 * tile_bytes(w.shape, w.dtype.itemsize)
        wgt += 2 * tile_bytes(b.shape, 4)
    est = 2 * (act + wgt) + (4 << 20)            # 2x margin + 4 MiB headroom
    try:                                         # generation-aware ceiling (~75% of VMEM)
        cap = int(0.75 * pltpu.get_tpu_info().vmem_capacity_bytes)
    except Exception:
        cap = 48 << 20                           # safe on v7x (64 MiB per TensorCore)
    return int(min(max(est, 16 << 20), cap))


@jax.jit
def neural_network_forward(x, packed_params):
    """Pallas implementation of NeuralNetwork.forward.

    x: [B, input_dim] float32
    packed_params: list of (w [in, out] bf16, b [1, out] f32) from pack_params().
    returns: squeeze(view(out, (B, -1)))  -- matches torch semantics.
    """
    num_layers = len(packed_params)
    B, D = x.shape
    assert packed_params[0][0].shape[0] == D
    out_dim = packed_params[-1][0].shape[1]

    # Batch tiling: split the batch into (at least) 2 fat tiles so the "parallel"
    # grid axis can be sharded across v7x's two TensorCores, while v5e/v6e still get
    # large tiles (2 steps of ~B/2 rows amortize the per-step overhead).
    TB = min(1024, max(8, _round_up(pl.cdiv(B, 2), 8)))
    Bp = _round_up(B, TB)
    grid = (Bp // TB,)

    # Only batch rows are zero-padded; feature lanes stay at their real width.
    x_p = x if Bp == B else jnp.zeros((Bp, D), x.dtype).at[:B, :].set(x)

    kernel_args = [x_p]
    in_specs = [pl.BlockSpec((TB, D), lambda i: (i, 0))]
    for w_p, b_p in packed_params:
        kernel_args += [w_p, b_p]
        # Constant index_maps -> weights/biases stay resident across grid steps.
        in_specs += [
            pl.BlockSpec(w_p.shape, lambda i: (0, 0)),
            pl.BlockSpec(b_p.shape, lambda i: (0, 0)),
        ]

    out_padded = pl.pallas_call(
        make_mlp_kernel(num_layers),
        out_shape=jax.ShapeDtypeStruct((Bp, out_dim), x.dtype),
        grid=grid,
        in_specs=in_specs,
        # Unpadded output block: a tiny masked store beats 128x padded HBM traffic
        # plus a separate slicing op afterwards.
        out_specs=pl.BlockSpec((TB, out_dim), lambda i: (i, 0)),
        compiler_params=pltpu.CompilerParams(
            dimension_semantics=("parallel",),
            vmem_limit_bytes=_vmem_budget_bytes(TB, D, packed_params),
        ),
    )(*kernel_args)

    out = out_padded if Bp == B else out_padded[:B]
    # torch: out.view(out.size(0), -1).squeeze()
    # NOTE: like torch's .squeeze(), this also collapses the batch dim when B == 1.
    return jnp.squeeze(out.reshape(B, -1))


if __name__ == "__main__":
    # Actigraphy-style MLP regressor (the pipeline trains with ~1000-row batches).
    batch = 512
    input_dim = 16
    hidden_layer_dims = [32, 32]
    output_dim = 1

    key = jax.random.PRNGKey(0)
    key, kx = jax.random.split(key)
    x = jax.random.normal(kx, (batch, input_dim), dtype=jnp.float32)

    params = init_params(key, input_dim, output_dim, hidden_layer_dims)
    packed = pack_params(params)   # bf16 cast + hidden-lane padding, once, outside jit

    y = neural_network_forward(x, packed)
    jax.block_until_ready(y)

    # Pure-JAX reference using the same bf16-weight / f32-accumulation math.
    h = x
    for i, (w, b) in enumerate(params):
        h = jnp.dot(h.astype(jnp.bfloat16).astype(jnp.float32),
                    w.astype(jnp.bfloat16).astype(jnp.float32)) + b
        if i < len(params) - 1:
            h = jnp.maximum(h, 0.0)
    ref = jnp.squeeze(h.reshape(batch, -1))

    assert y.shape == ref.shape == (batch,)
    assert jnp.allclose(y, ref, atol=1e-4, rtol=1e-3), float(jnp.max(jnp.abs(y - ref)))

    print("KERNEL_OK")
</pallas_src>

<mosaic_0001>
module attributes {stable_mosaic.version = 11 : i64} {
  func.func @kernel(%arg0: i32, %arg1: memref<256x16xf32, #tpu.memory_space<vmem>>, %arg2: memref<16x128xbf16, #tpu.memory_space<vmem>>, %arg3: memref<1x128xf32, #tpu.memory_space<vmem>>, %arg4: memref<128x128xbf16, #tpu.memory_space<vmem>>, %arg5: memref<1x128xf32, #tpu.memory_space<vmem>>, %arg6: memref<128x1xbf16, #tpu.memory_space<vmem>>, %arg7: memref<1x1xf32, #tpu.memory_space<vmem>>, %arg8: memref<256x1xf32, #tpu.memory_space<vmem>>) attributes {dimension_semantics = [#tpu.dimension_semantics<parallel>], iteration_bounds = array<i64: 2>, scalar_prefetch = 0 : i64, scratch_operands = 0 : i64, tpu.core_type = #tpu.core_type<tc>, window_params = [{transform_indices = @transform_0, window_bounds = array<i64: 256, 16>}, {pipeline_mode = #tpu.pipeline_mode<synchronous>, transform_indices = @transform_1, window_bounds = array<i64: 16, 128>}, {pipeline_mode = #tpu.pipeline_mode<synchronous>, transform_indices = @transform_2, window_bounds = array<i64: 1, 128>}, {pipeline_mode = #tpu.pipeline_mode<synchronous>, transform_indices = @transform_3, window_bounds = array<i64: 128, 128>}, {pipeline_mode = #tpu.pipeline_mode<synchronous>, transform_indices = @transform_4, window_bounds = array<i64: 1, 128>}, {pipeline_mode = #tpu.pipeline_mode<synchronous>, transform_indices = @transform_5, window_bounds = array<i64: 128, 1>}, {pipeline_mode = #tpu.pipeline_mode<synchronous>, transform_indices = @transform_6, window_bounds = array<i64: 1, 1>}, {transform_indices = @transform_7, window_bounds = array<i64: 256, 1>}]} {
    %c0 = arith.constant 0 : index
    %c0_0 = arith.constant 0 : index
    %0 = vector.load %arg1[%c0, %c0_0] : memref<256x16xf32, #tpu.memory_space<vmem>>, vector<256x16xf32>
    %c0_1 = arith.constant 0 : index
    %c0_2 = arith.constant 0 : index
    %1 = vector.load %arg2[%c0_1, %c0_2] : memref<16x128xbf16, #tpu.memory_space<vmem>>, vector<16x128xbf16>
    %c0_3 = arith.constant 0 : index
    %c0_4 = arith.constant 0 : index
    %2 = vector.load %arg3[%c0_3, %c0_4] : memref<1x128xf32, #tpu.memory_space<vmem>>, vector<1x128xf32>
    %3 = arith.truncf %0 : vector<256x16xf32> to vector<256x16xbf16>
    %cst = arith.constant dense<0.000000e+00> : vector<256x128xf32>
    %4 = tpu.matmul %3, %1, %cst {dimension_numbers = #tpu.dot_dimension_numbers<[1], [0], [0], [1], [0, 0, 1, 1], [], []>} : vector<256x16xbf16>, vector<16x128xbf16>, vector<256x128xf32> -> vector<256x128xf32>
    %5 = vector.broadcast %2 : vector<1x128xf32> to vector<256x128xf32>
    %6 = arith.addf %4, %5 : vector<256x128xf32>
    %cst_5 = arith.constant 0.000000e+00 : f32
    %7 = vector.broadcast %cst_5 : f32 to vector<256x128xf32>
    %8 = arith.maximumf %6, %7 : vector<256x128xf32>
    %c0_6 = arith.constant 0 : index
    %c0_7 = arith.constant 0 : index
    %9 = vector.load %arg4[%c0_6, %c0_7] : memref<128x128xbf16, #tpu.memory_space<vmem>>, vector<128x128xbf16>
    %c0_8 = arith.constant 0 : index
    %c0_9 = arith.constant 0 : index
    %10 = vector.load %arg5[%c0_8, %c0_9] : memref<1x128xf32, #tpu.memory_space<vmem>>, vector<1x128xf32>
    %11 = arith.truncf %8 : vector<256x128xf32> to vector<256x128xbf16>
    %cst_10 = arith.constant dense<0.000000e+00> : vector<256x128xf32>
    %12 = tpu.matmul %11, %9, %cst_10 {dimension_numbers = #tpu.dot_dimension_numbers<[1], [0], [0], [1], [0, 0, 1, 1], [], []>} : vector<256x128xbf16>, vector<128x128xbf16>, vector<256x128xf32> -> vector<256x128xf32>
    %13 = vector.broadcast %10 : vector<1x128xf32> to vector<256x128xf32>
    %14 = arith.addf %12, %13 : vector<256x128xf32>
    %cst_11 = arith.constant 0.000000e+00 : f32
    %15 = vector.broadcast %cst_11 : f32 to vector<256x128xf32>
    %16 = arith.maximumf %14, %15 : vector<256x128xf32>
    %c0_12 = arith.constant 0 : index
    %c0_13 = arith.constant 0 : index
    %17 = vector.load %arg6[%c0_12, %c0_13] : memref<128x1xbf16, #tpu.memory_space<vmem>>, vector<128x1xbf16>
    %c0_14 = arith.constant 0 : index
    %c0_15 = arith.constant 0 : index
    %18 = vector.load %arg7[%c0_14, %c0_15] : memref<1x1xf32, #tpu.memory_space<vmem>>, vector<1x1xf32>
    %19 = arith.truncf %16 : vector<256x128xf32> to vector<256x128xbf16>
    %cst_16 = arith.constant dense<0.000000e+00> : vector<256x1xf32>
    %20 = tpu.matmul %19, %17, %cst_16 {dimension_numbers = #tpu.dot_dimension_numbers<[1], [0], [0], [1], [0, 0, 1, 1], [], []>} : vector<256x128xbf16>, vector<128x1xbf16>, vector<256x1xf32> -> vector<256x1xf32>
    %21 = vector.broadcast %18 : vector<1x1xf32> to vector<256x1xf32>
    %22 = arith.addf %20, %21 : vector<256x1xf32>
    %c0_17 = arith.constant 0 : index
    %c0_18 = arith.constant 0 : index
    %23 = vector.load %arg8[%c0_17, %c0_18] : memref<256x1xf32, #tpu.memory_space<vmem>>, vector<256x1xf32>
    tpu.vector_store %arg8[%c0_17, %c0_18], %22 {strides = array<i32>} : memref<256x1xf32, #tpu.memory_space<vmem>>, vector<256x1xf32>,
    return
  }
  func.func @transform_0(%arg0: i32) -> (i32, i32) {
    %c0_i32 = arith.constant 0 : i32
    %c0_i32_0 = arith.constant 0 : i32
    return %arg0, %c0_i32 : i32, i32
  }
  func.func @transform_1(%arg0: i32) -> (i32, i32) {
    %c0_i32 = arith.constant 0 : i32
    %c0_i32_0 = arith.constant 0 : i32
    %c0_i32_1 = arith.constant 0 : i32
    return %c0_i32, %c0_i32_0 : i32, i32
  }
  func.func @transform_2(%arg0: i32) -> (i32, i32) {
    %c0_i32 = arith.constant 0 : i32
    %c0_i32_0 = arith.constant 0 : i32
    %c0_i32_1 = arith.constant 0 : i32
    return %c0_i32, %c0_i32_0 : i32, i32
  }
  func.func @transform_3(%arg0: i32) -> (i32, i32) {
    %c0_i32 = arith.constant 0 : i32
    %c0_i32_0 = arith.constant 0 : i32
    %c0_i32_1 = arith.constant 0 : i32
    return %c0_i32, %c0_i32_0 : i32, i32
  }
  func.func @transform_4(%arg0: i32) -> (i32, i32) {
    %c0_i32 = arith.constant 0 : i32
    %c0_i32_0 = arith.constant 0 : i32
    %c0_i32_1 = arith.constant 0 : i32
    return %c0_i32, %c0_i32_0 : i32, i32
  }
  func.func @transform_5(%arg0: i32) -> (i32, i32) {
    %c0_i32 = arith.constant 0 : i32
    %c0_i32_0 = arith.constant 0 : i32
    %c0_i32_1 = arith.constant 0 : i32
    return %c0_i32, %c0_i32_0 : i32, i32
  }
  func.func @transform_6(%arg0: i32) -> (i32, i32) {
    %c0_i32 = arith.constant 0 : i32
    %c0_i32_0 = arith.constant 0 : i32
    %c0_i32_1 = arith.constant 0 : i32
    return %c0_i32, %c0_i32_0 : i32, i32
  }
  func.func @transform_7(%arg0: i32) -> (i32, i32) {
    %c0_i32 = arith.constant 0 : i32
    %c0_i32_0 = arith.constant 0 : i32
    return %arg0, %c0_i32 : i32, i32
  }
}

</mosaic_0001>

<llo_original>
// kernel: neural_network_forward.1
$region0: #{neural_network_forward.1}
  #allocation0 [shape = 'u32[]', space=smem, size = 0x4, offset = 0x4, fixed_abs, tag = 'smem constant byte address 0x4 - core index']
  #allocation1 [shape = 'u32[72,128]{1,0:T(1,128)}', space=vmem, size = 0x9000, scoped, tag = 'internal scratch']
  #allocation2 [shape = 'f32[1,1]{1,0:T(1,128)S(1)}', space=vmem, size = 0x200, scoped, tag = 'scoped memory for neural_network_forward.1']
  %s0 = inlined_call_operand.vmem [shape: f32[512,16], index: 0, kind: input, shape index: {}]
  %s1 = inlined_call_operand.vmem [shape: bf16[16,128], index: 1, kind: input, shape index: {}]
  %s2 = inlined_call_operand.vmem [shape: f32[1,128], index: 2, kind: input, shape index: {}]
  %s3 = inlined_call_operand.vmem [shape: bf16[128,128], index: 3, kind: input, shape index: {}]
  %s4 = inlined_call_operand.vmem [shape: f32[1,128], index: 4, kind: input, shape index: {}]
  %s5 = inlined_call_operand.vmem [shape: bf16[128,1], index: 5, kind: input, shape index: {}]
  %s6 = inlined_call_operand.<no memory space> [shape: f32[1,1], index: 6, kind: input, shape index: {}]
  %s7 = inlined_call_operand.vmem [shape: f32[512,1], index: 7, kind: output, shape index: {}]
  %s8 = sld [smem:[#allocation0]]
  $region61: #{neural_network_forward.1} parent=0
    _
  %s10 = ssub.s32 1, %s8
  %s11 = scalar_select 0, %s10, %s8
  %v12 = vstv %s6
  %13 = vst [vmem:[#allocation2] sm:$0x1] %v12
  loop: start=0, step=1, limit=4
  $region2: #{neural_network_forward.1} parent=0 // loop_pre_header
    _
  $region3: #{neural_network_forward.1} parent=0 // loop_header
    %s15 = sphi 0, %s19
    %p16 = scmp.ge.s32.totalorder %s15, 4
    %s25 = sphi 0, %s27
    %s28 = sphi 0, %s25
    %s29 = sphi 0, %s28
    %s45 = sphi 0, %s29
    %s49 = sphi 0, %s49
    %s51 = sphi 0, %s49
    %s52 = sphi 0, %s51
    %s66 = sphi 0, %s52
    %s70 = sphi 0, %s70
    %s72 = sphi 0, %s70
    %s73 = sphi 0, %s72
    %s87 = sphi 0, %s73
    %s91 = sphi 0, %s91
    %s93 = sphi 0, %s91
    %s94 = sphi 0, %s93
    %s108 = sphi 0, %s94
    %s112 = sphi 0, %s112
    %s114 = sphi 0, %s112
    %s115 = sphi 0, %s114
    %s129 = sphi 0, %s115
    %s133 = sphi 0, %s133
    %s135 = sphi 0, %s133
    %s136 = sphi 0, %s135
    %s150 = sphi 0, %s136
    %s154 = sphi 0, %s154
    %s156 = sphi 0, %s154
    %s157 = sphi 0, %s156
    %s171 = sphi 0, %s157
    %s177 = sphi 0, %s179
    %s180 = sphi 0, %s177
    %s181 = sphi 0, %s180
    %s197 = sphi 0, %s181
  $region4: #{neural_network_forward.1} parent=0 // loop_header_branch
    %18 = sbr.rel (%p16) target = $region8
  $region5: #{neural_network_forward.1} parent=0 // loop_body
    %s20 = ssub.s32 %s15, 1
    %s21 = ssub.s32 %s15, 2
    %s22 = sadd.s32 %s15, 1
    %s23 = ssub.s32 %s15, %s22
    %p24 = scmp.eq.s32.totalorder %s23, 0
    %s26 = sadd.s32 %s25, 1
    %s27 = scalar_select %p24, %s25, %s26
    %p30 = pneg %p24
    %p31 = scmp.eq.s32.totalorder %s15, 1
    %p32 = por %p30, %p31
    %p33 = scmp.ne.s32.totalorder %s25, %s28
    %p34 = scmp.eq.s32.totalorder %s15, 0
    %p35 = por %p33, %p34
    %p36 = scmp.ne.s32.totalorder %s25, %s28
    %p37 = scmp.eq.s32.totalorder %s20, 1
    %p38 = por %p36, %p37
    %p39 = scmp.ne.s32.totalorder %s28, %s29
    %p40 = scmp.eq.s32.totalorder %s20, 0
    %p41 = por %p39, %p40
    %p42 = scmp.ne.s32.totalorder %s28, %s29
    %p43 = scmp.eq.s32.totalorder %s21, 1
    %p44 = por %p42, %p43
    %p46 = scmp.ne.s32.totalorder %s29, %s45
    %p47 = scmp.eq.s32.totalorder %s21, 0
    %p48 = por %p46, %p47
    %s50 = sadd.s32 %s49, 1
    %p53 = scmp.eq.s32.totalorder %s15, 1
    %p54 = scmp.ne.s32.totalorder %s49, %s51
    %p55 = scmp.eq.s32.totalorder %s15, 0
    %p56 = por %p54, %p55
    %p57 = scmp.ne.s32.totalorder %s49, %s51
    %p58 = scmp.eq.s32.totalorder %s20, 1
    %p59 = por %p57, %p58
    %p60 = scmp.ne.s32.totalorder %s51, %s52
    %p61 = scmp.eq.s32.totalorder %s20, 0
    %p62 = por %p60, %p61
    %p63 = scmp.ne.s32.totalorder %s51, %s52
    %p64 = scmp.eq.s32.totalorder %s21, 1
    %p65 = por %p63, %p64
    %p67 = scmp.ne.s32.totalorder %s52, %s66
    %p68 = scmp.eq.s32.totalorder %s21, 0
    %p69 = por %p67, %p68
    %s71 = sadd.s32 %s70, 1
    %p74 = scmp.eq.s32.totalorder %s15, 1
    %p75 = scmp.ne.s32.totalorder %s70, %s72
    %p76 = scmp.eq.s32.totalorder %s15, 0
    %p77 = por %p75, %p76
    %p78 = scmp.ne.s32.totalorder %s70, %s72
    %p79 = scmp.eq.s32.totalorder %s20, 1
    %p80 = por %p78, %p79
    %p81 = scmp.ne.s32.totalorder %s72, %s73
    %p82 = scmp.eq.s32.totalorder %s20, 0
    %p83 = por %p81, %p82
    %p84 = scmp.ne.s32.totalorder %s72, %s73
    %p85 = scmp.eq.s32.totalorder %s21, 1
    %p86 = por %p84, %p85
    %p88 = scmp.ne.s32.totalorder %s73, %s87
    %p89 = scmp.eq.s32.totalorder %s21, 0
    %p90 = por %p88, %p89
    %s92 = sadd.s32 %s91, 1
    %p95 = scmp.eq.s32.totalorder %s15, 1
    %p96 = scmp.ne.s32.totalorder %s91, %s93
    %p97 = scmp.eq.s32.totalorder %s15, 0
    %p98 = por %p96, %p97
    %p99 = scmp.ne.s32.totalorder %s91, %s93
    %p100 = scmp.eq.s32.totalorder %s20, 1
    %p101 = por %p99, %p100
    %p102 = scmp.ne.s32.totalorder %s93, %s94
    %p103 = scmp.eq.s32.totalorder %s20, 0
    %p104 = por %p102, %p103
    %p105 = scmp.ne.s32.totalorder %s93, %s94
    %p106 = scmp.eq.s32.totalorder %s21, 1
    %p107 = por %p105, %p106
    %p109 = scmp.ne.s32.totalorder %s94, %s108
    %p110 = scmp.eq.s32.totalorder %s21, 0
    %p111 = por %p109, %p110
    %s113 = sadd.s32 %s112, 1
    %p116 = scmp.eq.s32.totalorder %s15, 1
    %p117 = scmp.ne.s32.totalorder %s112, %s114
    %p118 = scmp.eq.s32.totalorder %s15, 0
    %p119 = por %p117, %p118
    %p120 = scmp.ne.s32.totalorder %s112, %s114
    %p121 = scmp.eq.s32.totalorder %s20, 1
    %p122 = por %p120, %p121
    %p123 = scmp.ne.s32.totalorder %s114, %s115
    %p124 = scmp.eq.s32.totalorder %s20, 0
    %p125 = por %p123, %p124
    %p126 = scmp.ne.s32.totalorder %s114, %s115
    %p127 = scmp.eq.s32.totalorder %s21, 1
    %p128 = por %p126, %p127
    %p130 = scmp.ne.s32.totalorder %s115, %s129
    %p131 = scmp.eq.s32.totalorder %s21, 0
    %p132 = por %p130, %p131
    %s134 = sadd.s32 %s133, 1
    %p137 = scmp.eq.s32.totalorder %s15, 1
    %p138 = scmp.ne.s32.totalorder %s133, %s135
    %p139 = scmp.eq.s32.totalorder %s15, 0
    %p140 = por %p138, %p139
    %p141 = scmp.ne.s32.totalorder %s133, %s135
    %p142 = scmp.eq.s32.totalorder %s20, 1
    %p143 = por %p141, %p142
    %p144 = scmp.ne.s32.totalorder %s135, %s136
    %p145 = scmp.eq.s32.totalorder %s20, 0
    %p146 = por %p144, %p145
    %p147 = scmp.ne.s32.totalorder %s135, %s136
    %p148 = scmp.eq.s32.totalorder %s21, 1
    %p149 = por %p147, %p148
    %p151 = scmp.ne.s32.totalorder %s136, %s150
    %p152 = scmp.eq.s32.totalorder %s21, 0
    %p153 = por %p151, %p152
    %s155 = sadd.s32 %s154, 1
    %p158 = scmp.eq.s32.totalorder %s15, 1
    %p159 = scmp.ne.s32.totalorder %s154, %s156
    %p160 = scmp.eq.s32.totalorder %s15, 0
    %p161 = por %p159, %p160
    %p162 = scmp.ne.s32.totalorder %s154, %s156
    %p163 = scmp.eq.s32.totalorder %s20, 1
    %p164 = por %p162, %p163
    %p165 = scmp.ne.s32.totalorder %s156, %s157
    %p166 = scmp.eq.s32.totalorder %s20, 0
    %p167 = por %p165, %p166
    %p168 = scmp.ne.s32.totalorder %s156, %s157
    %p169 = scmp.eq.s32.totalorder %s21, 1
    %p170 = por %p168, %p169
    %p172 = scmp.ne.s32.totalorder %s157, %s171
    %p173 = scmp.eq.s32.totalorder %s21, 0
    %p174 = por %p172, %p173
    %s175 = ssub.s32 %s15, %s22
    %p176 = scmp.eq.s32.totalorder %s175, 0
    %s178 = sadd.s32 %s177, 1
    %s179 = scalar_select %p176, %s177, %s178
    %p182 = pneg %p176
    %p183 = scmp.eq.s32.totalorder %s15, 1
    %p184 = por %p182, %p183
    %p185 = scmp.ne.s32.totalorder %s177, %s180
    %p186 = scmp.eq.s32.totalorder %s15, 0
    %p187 = por %p185, %p186
    %p188 = scmp.ne.s32.totalorder %s177, %s180
    %p189 = scmp.eq.s32.totalorder %s20, 1
    %p190 = por %p188, %p189
    %p191 = scmp.ne.s32.totalorder %s180, %s181
    %p192 = scmp.eq.s32.totalorder %s20, 0
    %p193 = por %p191, %p192
    %p194 = scmp.ne.s32.totalorder %s180, %s181
    %p195 = scmp.eq.s32.totalorder %s21, 1
    %p196 = por %p194, %p195
    %p198 = scmp.ne.s32.totalorder %s181, %s197
    %p199 = scmp.eq.s32.totalorder %s21, 0
    %p200 = por %p198, %p199
    %p201 = scmp.le.s32.totalorder 1, %s15
    %p202 = scmp.lt.s32.totalorder %s15, 3
    %p203 = pnand %p201, %p202
    %p204 = pneg %p203
    // Predicated region
    $region9: #{neural_network_forward.1} parent=5 // pred_check
      _
    $region10: #{neural_network_forward.1} parent=5 // pred_check_branch
      %206 = sbr.rel (%p203) target = $region12
    $region11: #{neural_network_forward.1} parent=5 // pred_region
      %s207 = ssub.s32 %s15, 1
      // Predicated region
      $region13: #{neural_network_forward.1} parent=11 // pred_check
        %p208 = pneg %p62
      $region14: #{neural_network_forward.1} parent=11 // pred_check_branch
        %210 = sbr.rel (%p208) target = $region16
      $region15: #{neural_network_forward.1} parent=11 // pred_region
        _
      $region16: #{neural_network_forward.1} parent=11 // pred_fallthru
        _
      // Predicated region
      $region17: #{neural_network_forward.1} parent=11 // pred_check
        %p211 = pneg %p83
      $region18: #{neural_network_forward.1} parent=11 // pred_check_branch
        %213 = sbr.rel (%p211) target = $region20
      $region19: #{neural_network_forward.1} parent=11 // pred_region
        _
      $region20: #{neural_network_forward.1} parent=11 // pred_fallthru
        _
      // Predicated region
      $region21: #{neural_network_forward.1} parent=11 // pred_check
        %p214 = pneg %p104
      $region22: #{neural_network_forward.1} parent=11 // pred_check_branch
        %216 = sbr.rel (%p214) target = $region24
      $region23: #{neural_network_forward.1} parent=11 // pred_region
        _
      $region24: #{neural_network_forward.1} parent=11 // pred_fallthru
        _
      // Predicated region
      $region25: #{neural_network_forward.1} parent=11 // pred_check
        %p217 = pneg %p125
      $region26: #{neural_network_forward.1} parent=11 // pred_check_branch
        %219 = sbr.rel (%p217) target = $region28
      $region27: #{neural_network_forward.1} parent=11 // pred_region
        _
      $region28: #{neural_network_forward.1} parent=11 // pred_fallthru
        _
      // Predicated region
      $region29: #{neural_network_forward.1} parent=11 // pred_check
        %p220 = pneg %p146
      $region30: #{neural_network_forward.1} parent=11 // pred_check_branch
        %222 = sbr.rel (%p220) target = $region32
      $region31: #{neural_network_forward.1} parent=11 // pred_region
        _
      $region32: #{neural_network_forward.1} parent=11 // pred_fallthru
        _
      // Predicated region
      $region33: #{neural_network_forward.1} parent=11 // pred_check
        %p223 = pneg %p167
      $region34: #{neural_network_forward.1} parent=11 // pred_check_branch
        %225 = sbr.rel (%p223) target = $region36
      $region35: #{neural_network_forward.1} parent=11 // pred_region
        _
      $region36: #{neural_network_forward.1} parent=11 // pred_fallthru
        _
    $region12: #{neural_network_forward.1} parent=5 // pred_fallthru
      _
    %p226 = scmp.lt.s32.totalorder %s15, 2
    // Predicated region
    $region37: #{neural_network_forward.1} parent=5 // pred_check
      %p227 = pneg %p226
    $region38: #{neural_network_forward.1} parent=5 // pred_check_branch
      %229 = sbr.rel (%p227) target = $region40
    $region39: #{neural_network_forward.1} parent=5 // pred_region
      // Predicated region
      $region41: #{neural_network_forward.1} parent=39 // pred_check
        %p230 = pneg %p35
      $region42: #{neural_network_forward.1} parent=39 // pred_check_branch
        %232 = sbr.rel (%p230) target = $region44
      $region43: #{neural_network_forward.1} parent=39 // pred_region
        %s233 = smul.u32 32, %s15
        %p234 = scmp.lt.s32.totalorder %s233, 63
        %s235 = scalar_select %p234, %s233, 63
        %s236 = smul.addr %s235, 8
        %s237 = scalar_lea.vmem %s0, %s236
        %s238 = smul.u32 32, %s15
      $region44: #{neural_network_forward.1} parent=39 // pred_fallthru
        _
    $region40: #{neural_network_forward.1} parent=5 // pred_fallthru
      _
    %p239 = scmp.le.s32.totalorder 1, %s15
    %p240 = scmp.lt.s32.totalorder %s15, 3
    %p241 = pnand %p239, %p240
    %p242 = pneg %p241
    // Predicated region
    $region45: #{neural_network_forward.1} parent=5 // pred_check
      _
    $region46: #{neural_network_forward.1} parent=5 // pred_check_branch
      %244 = sbr.rel (%p241) target = $region48
    $region47: #{neural_network_forward.1} parent=5 // pred_region
      %s245 = ssub.s32 %s15, 1
      %s246 = smul.u32 32, %s20
      %p247 = scmp.lt.s32.totalorder %s246, 63
      %s248 = scalar_select %p247, %s246, 63
      %s249 = smul.addr %s248, 8
      %s250 = scalar_lea.vmem %s0, %s249
      %p251 = pneg %p41
      %p252 = pneg %p38
      %p253 = pneg %p62
      %p254 = pneg %p59
      %p255 = pneg %p83
      %p256 = pneg %p80
      %p257 = pneg %p104
      %p258 = pneg %p101
      %p259 = pneg %p125
      %p260 = pneg %p122
      %p261 = pneg %p146
      %p262 = pneg %p143
      %p263 = pneg %p167
      %p264 = pneg %p164
      %p265 = pneg %p193
      %p266 = pneg %p190
      %s267 = smul.u32 32, %s20
      %p268 = scmp.lt.s32.totalorder %s267, 63
      %s269 = scalar_select %p268, %s267, 63
      %s270 = smul.addr %s269, 8
      %s271 = scalar_lea.vmem %s7, %s270
      %s272 = smul.u32 32, %s20
      %p273 = scmp.lt.s32.totalorder %s272, 63
      %s274 = scalar_select %p273, %s272, 63
      %s275 = smul.addr %s274, 8
      %s276 = scalar_lea.vmem %s0, %s275
      %s277 = smul.u32 32, %s20
      %s278 = smul.u32 32, %s20
      %p279 = scmp.lt.s32.totalorder %s278, 63
      %s280 = scalar_select %p279, %s278, 63
      %s281 = smul.addr %s280, 8
      %s282 = scalar_lea.vmem %s7, %s281
      %s283 = smul.u32 32, %s20
      %v285 = vld [vmem:[%s276] sm:$0xff]
      %v286 = vld [vmem:[%s276 + $0x8] sm:$0xff]
      %v287 = vld [vmem:[%s276 + $0x10] sm:$0xff]
      %v288 = vld [vmem:[%s276 + $0x18] sm:$0xff]
      %v289 = vld [vmem:[%s276 + $0x20] sm:$0xff]
      %v290 = vld [vmem:[%s276 + $0x28] sm:$0xff]
      %v291 = vld [vmem:[%s276 + $0x30] sm:$0xff]
      %v292 = vld [vmem:[%s276 + $0x38] sm:$0xff]
      %v293 = vld [vmem:[%s276 + $0x40] sm:$0xff]
      %v294 = vld [vmem:[%s276 + $0x48] sm:$0xff]
      %v295 = vld [vmem:[%s276 + $0x50] sm:$0xff]
      %v296 = vld [vmem:[%s276 + $0x58] sm:$0xff]
      %v297 = vld [vmem:[%s276 + $0x60] sm:$0xff]
      %v298 = vld [vmem:[%s276 + $0x68] sm:$0xff]
      %v299 = vld [vmem:[%s276 + $0x70] sm:$0xff]
      %v300 = vld [vmem:[%s276 + $0x78] sm:$0xff]
      %v301 = vld [vmem:[%s276 + $0x80] sm:$0xff]
      %v302 = vld [vmem:[%s276 + $0x88] sm:$0xff]
      %v303 = vld [vmem:[%s276 + $0x90] sm:$0xff]
      %v304 = vld [vmem:[%s276 + $0x98] sm:$0xff]
      %v305 = vld [vmem:[%s276 + $0xa0] sm:$0xff]
      %v306 = vld [vmem:[%s276 + $0xa8] sm:$0xff]
      %v307 = vld [vmem:[%s276 + $0xb0] sm:$0xff]
      %v308 = vld [vmem:[%s276 + $0xb8] sm:$0xff]
      %v309 = vld [vmem:[%s276 + $0xc0] sm:$0xff]
      %v310 = vld [vmem:[%s276 + $0xc8] sm:$0xff]
      %v311 = vld [vmem:[%s276 + $0xd0] sm:$0xff]
      %v312 = vld [vmem:[%s276 + $0xd8] sm:$0xff]
      %v313 = vld [vmem:[%s276 + $0xe0] sm:$0xff]
      %v314 = vld [vmem:[%s276 + $0xe8] sm:$0xff]
      %v315 = vld [vmem:[%s276 + $0xf0] sm:$0xff]
      %v316 = vld [vmem:[%s276 + $0xf8] sm:$0xff]
      %v317 = vld [vmem:[%s1] sm:$0xf]
      %v318 = vld [vmem:[%s1 + $0x4] sm:$0xf]
      %v319 = vld [vmem:[%s2] sm:$0x1]
      %v320 = vpack.c.bf16 %v286, %v285
      %v321 = vpack.c.bf16 %v288, %v287
      %v322 = vpack.c.bf16 %v290, %v289
      %v323 = vpack.c.bf16 %v292, %v291
      %v324 = vpack.c.bf16 %v294, %v293
      %v325 = vpack.c.bf16 %v296, %v295
      %v326 = vpack.c.bf16 %v298, %v297
      %v327 = vpack.c.bf16 %v300, %v299
      %v328 = vpack.c.bf16 %v302, %v301
      %v329 = vpack.c.bf16 %v304, %v303
      %v330 = vpack.c.bf16 %v306, %v305
      %v331 = vpack.c.bf16 %v308, %v307
      %v332 = vpack.c.bf16 %v310, %v309
      %v333 = vpack.c.bf16 %v312, %v311
      %v334 = vpack.c.bf16 %v314, %v313
      %v335 = vpack.c.bf16 %v316, %v315
      %v337 = vperm.slane %v319, 0
      %v341 = vunpack.c.l.b16 %v317
      %v342 = vunpack.c.l.b16 %v318
      %v343 = vpack.c.b16 %v342, %v341
      %vm345 = vcmask 130048
      %v347 = vsel %vm345, %v320, 0
      %v350 = vsel %vm345, %v321, 0
      %v353 = vsel %vm345, %v322, 0
      %v356 = vsel %vm345, %v323, 0
      %v359 = vsel %vm345, %v324, 0
      %v362 = vsel %vm345, %v325, 0
      %v365 = vsel %vm345, %v326, 0
      %v368 = vsel %vm345, %v327, 0
      %v371 = vsel %vm345, %v328, 0
      %v374 = vsel %vm345, %v329, 0
      %v377 = vsel %vm345, %v330, 0
      %v380 = vsel %vm345, %v331, 0
      %v383 = vsel %vm345, %v332, 0
      %v386 = vsel %vm345, %v333, 0
      %v389 = vsel %vm345, %v334, 0
      %v392 = vsel %vm345, %v335, 0
      %394 = vmatpush.bf16.msra.mxu0 0
      %395 = vmatpush.bf16.msra.mxu0 0
      %396 = vmatpush.bf16.msra.mxu0 0
      %397 = vmatpush.bf16.msra.mxu0 0
      %398 = vmatpush.bf16.msra.mxu0 0
      %399 = vmatpush.bf16.msra.mxu0 0
      %400 = vmatpush.bf16.msra.mxu0 0
      %401 = vmatpush.bf16.msra.mxu0 %v343
      %402 = vmatmul.bf16.gmra.mxu0 %v347
      %v403 = vpop.f32.mrf.mxu0
      %v404 = vadd.f32 %v337, %v403
      %v405 = vpop.f32.mrf.mxu0
      %v406 = vadd.f32 %v337, %v405
      %407 = vmatmul.bf16.gmra.mxu0 %v350
      %v408 = vpop.f32.mrf.mxu0
      %v409 = vadd.f32 %v337, %v408
      %v410 = vpop.f32.mrf.mxu0
      %v411 = vadd.f32 %v337, %v410
      %412 = vmatmul.bf16.gmra.mxu0 %v353
      %v413 = vpop.f32.mrf.mxu0
      %v414 = vadd.f32 %v337, %v413
      %v415 = vpop.f32.mrf.mxu0
      %v416 = vadd.f32 %v337, %v415
      %417 = vmatmul.bf16.gmra.mxu0 %v356
      %v418 = vpop.f32.mrf.mxu0
      %v419 = vadd.f32 %v337, %v418
      %v420 = vpop.f32.mrf.mxu0
      %v421 = vadd.f32 %v337, %v420
      %422 = vmatmul.bf16.gmra.mxu0 %v359
      %v423 = vpop.f32.mrf.mxu0
      %v424 = vadd.f32 %v337, %v423
      %v425 = vpop.f32.mrf.mxu0
      %v426 = vadd.f32 %v337, %v425
      %427 = vmatmul.bf16.gmra.mxu0 %v362
      %v428 = vpop.f32.mrf.mxu0
      %v429 = vadd.f32 %v337, %v428
      %v430 = vpop.f32.mrf.mxu0
      %v431 = vadd.f32 %v337, %v430
      %432 = vmatmul.bf16.gmra.mxu0 %v365
      %v433 = vpop.f32.mrf.mxu0
      %v434 = vadd.f32 %v337, %v433
      %v435 = vpop.f32.mrf.mxu0
      %v436 = vadd.f32 %v337, %v435
      %437 = vmatmul.bf16.gmra.mxu0 %v368
      %v438 = vpop.f32.mrf.mxu0
      %v439 = vadd.f32 %v337, %v438
      %v440 = vpop.f32.mrf.mxu0
      %v441 = vadd.f32 %v337, %v440
      %442 = vmatmul.bf16.gmra.mxu0 %v371
      %v443 = vpop.f32.mrf.mxu0
      %v444 = vadd.f32 %v337, %v443
      %v445 = vpop.f32.mrf.mxu0
      %v446 = vadd.f32 %v337, %v445
      %447 = vmatmul.bf16.gmra.mxu0 %v374
      %v448 = vpop.f32.mrf.mxu0
      %v449 = vadd.f32 %v337, %v448
      %v450 = vpop.f32.mrf.mxu0
      %v451 = vadd.f32 %v337, %v450
      %452 = vmatmul.bf16.gmra.mxu0 %v377
      %v453 = vpop.f32.mrf.mxu0
      %v454 = vadd.f32 %v337, %v453
      %v455 = vpop.f32.mrf.mxu0
      %v456 = vadd.f32 %v337, %v455
      %457 = vmatmul.bf16.gmra.mxu0 %v380
      %v458 = vpop.f32.mrf.mxu0
      %v459 = vadd.f32 %v337, %v458
      %v460 = vpop.f32.mrf.mxu0
      %v461 = vadd.f32 %v337, %v460
      %462 = vmatmul.bf16.gmra.mxu0 %v383
      %v463 = vpop.f32.mrf.mxu0
      %v464 = vadd.f32 %v337, %v463
      %v465 = vpop.f32.mrf.mxu0
      %v466 = vadd.f32 %v337, %v465
      %467 = vmatmul.bf16.gmra.mxu0 %v386
      %v468 = vpop.f32.mrf.mxu0
      %v469 = vadd.f32 %v337, %v468
      %v470 = vpop.f32.mrf.mxu0
      %v471 = vadd.f32 %v337, %v470
      %472 = vmatmul.bf16.gmra.mxu0 %v389
      %v473 = vpop.f32.mrf.mxu0
      %v474 = vadd.f32 %v337, %v473
      %v475 = vpop.f32.mrf.mxu0
      %v476 = vadd.f32 %v337, %v475
      %477 = vmatmul.bf16.gmra.mxu0 %v392
      %v478 = vpop.f32.mrf.mxu0
      %v479 = vadd.f32 %v337, %v478
      %v480 = vpop.f32.mrf.mxu0
      %v481 = vadd.f32 %v337, %v480
      %482 = vdwg.mxu0
      %v483 = vmax.f32 %v404, 0.0
      %v484 = vmax.f32 %v406, 0.0
      %v485 = vmax.f32 %v409, 0.0
      %v486 = vmax.f32 %v411, 0.0
      %v487 = vmax.f32 %v414, 0.0
      %v488 = vmax.f32 %v416, 0.0
      %v489 = vmax.f32 %v419, 0.0
      %v490 = vmax.f32 %v421, 0.0
      %v491 = vmax.f32 %v424, 0.0
      %v492 = vmax.f32 %v426, 0.0
      %v493 = vmax.f32 %v429, 0.0
      %v494 = vmax.f32 %v431, 0.0
      %v495 = vmax.f32 %v434, 0.0
      %v496 = vmax.f32 %v436, 0.0
      %v497 = vmax.f32 %v439, 0.0
      %v498 = vmax.f32 %v441, 0.0
      %v499 = vmax.f32 %v444, 0.0
      %v500 = vmax.f32 %v446, 0.0
      %v501 = vmax.f32 %v449, 0.0
      %v502 = vmax.f32 %v451, 0.0
      %v503 = vmax.f32 %v454, 0.0
      %v504 = vmax.f32 %v456, 0.0
      %v505 = vmax.f32 %v459, 0.0
      %v506 = vmax.f32 %v461, 0.0
      %v507 = vmax.f32 %v464, 0.0
      %v508 = vmax.f32 %v466, 0.0
      %v509 = vmax.f32 %v469, 0.0
      %v510 = vmax.f32 %v471, 0.0
      %v511 = vmax.f32 %v474, 0.0
      %v512 = vmax.f32 %v476, 0.0
      %v513 = vmax.f32 %v479, 0.0
      %v514 = vmax.f32 %v481, 0.0
      %v515 = vld [vmem:[%s3] sm:$0xf]
      %v516 = vld [vmem:[%s3 + $0x4] sm:$0xf]
      %v517 = vld [vmem:[%s3 + $0x8] sm:$0xf]
      %v518 = vld [vmem:[%s3 + $0xc] sm:$0xf]
      %v519 = vld [vmem:[%s3 + $0x10] sm:$0xf]
      %v520 = vld [vmem:[%s3 + $0x14] sm:$0xf]
      %v521 = vld [vmem:[%s3 + $0x18] sm:$0xf]
      %v522 = vld [vmem:[%s3 + $0x1c] sm:$0xf]
      %v523 = vld [vmem:[%s3 + $0x20] sm:$0xf]
      %v524 = vld [vmem:[%s3 + $0x24] sm:$0xf]
      %v525 = vld [vmem:[%s3 + $0x28] sm:$0xf]
      %v526 = vld [vmem:[%s3 + $0x2c] sm:$0xf]
      %v527 = vld [vmem:[%s3 + $0x30] sm:$0xf]
      %v528 = vld [vmem:[%s3 + $0x34] sm:$0xf]
      %v529 = vld [vmem:[%s3 + $0x38] sm:$0xf]
      %v530 = vld [vmem:[%s3 + $0x3c] sm:$0xf]
      %v531 = vld [vmem:[%s4] sm:$0x1]
      %v532 = vpack.c.bf16 %v484, %v483
      %v533 = vpack.c.bf16 %v486, %v485
      %v534 = vpack.c.bf16 %v488, %v487
      %v535 = vpack.c.bf16 %v490, %v489
      %v536 = vpack.c.bf16 %v492, %v491
      %v537 = vpack.c.bf16 %v494, %v493
      %v538 = vpack.c.bf16 %v496, %v495
      %v539 = vpack.c.bf16 %v498, %v497
      %v540 = vpack.c.bf16 %v500, %v499
      %v541 = vpack.c.bf16 %v502, %v501
      %v542 = vpack.c.bf16 %v504, %v503
      %v543 = vpack.c.bf16 %v506, %v505
      %v544 = vpack.c.bf16 %v508, %v507
      %v545 = vpack.c.bf16 %v510, %v509
      %v546 = vpack.c.bf16 %v512, %v511
      %v547 = vpack.c.bf16 %v514, %v513
      %v549 = vperm.slane %v531, 0
      %v567 = vunpack.c.l.b16 %v515
      %v568 = vunpack.c.l.b16 %v516
      %v569 = vunpack.c.l.b16 %v517
      %v570 = vunpack.c.l.b16 %v518
      %v571 = vunpack.c.l.b16 %v519
      %v572 = vunpack.c.l.b16 %v520
      %v573 = vunpack.c.l.b16 %v521
      %v574 = vunpack.c.l.b16 %v522
      %v575 = vunpack.c.l.b16 %v523
      %v576 = vunpack.c.l.b16 %v524
      %v577 = vunpack.c.l.b16 %v525
      %v578 = vunpack.c.l.b16 %v526
      %v579 = vunpack.c.l.b16 %v527
      %v580 = vunpack.c.l.b16 %v528
      %v581 = vunpack.c.l.b16 %v529
      %v582 = vunpack.c.l.b16 %v530
      %v583 = vpack.c.b16 %v568, %v567
      %v584 = vpack.c.b16 %v570, %v569
      %v585 = vpack.c.b16 %v572, %v571
      %v586 = vpack.c.b16 %v574, %v573
      %v587 = vpack.c.b16 %v576, %v575
      %v588 = vpack.c.b16 %v578, %v577
      %v589 = vpack.c.b16 %v580, %v579
      %v590 = vpack.c.b16 %v582, %v581
      %599 = vmatpush.bf16.msra.mxu0 %v590
      %600 = vmatpush.bf16.msra.mxu0 %v589
      %601 = vmatpush.bf16.msra.mxu0 %v588
      %602 = vmatpush.bf16.msra.mxu0 %v587
      %603 = vmatpush.bf16.msra.mxu0 %v586
      %604 = vmatpush.bf16.msra.mxu0 %v585
      %605 = vmatpush.bf16.msra.mxu0 %v584
      %606 = vmatpush.bf16.msra.mxu0 %v583
      %607 = vmatmul.bf16.gmra.mxu0 %v532
      %v608 = vpop.f32.mrf.mxu0
      %v609 = vadd.f32 %v549, %v608
      %v610 = vpop.f32.mrf.mxu0
      %v611 = vadd.f32 %v549, %v610
      %612 = vmatmul.bf16.gmra.mxu0 %v533
      %v613 = vpop.f32.mrf.mxu0
      %v614 = vadd.f32 %v549, %v613
      %v615 = vpop.f32.mrf.mxu0
      %v616 = vadd.f32 %v549, %v615
      %617 = vmatmul.bf16.gmra.mxu0 %v534
      %v618 = vpop.f32.mrf.mxu0
      %v619 = vadd.f32 %v549, %v618
      %v620 = vpop.f32.mrf.mxu0
      %v621 = vadd.f32 %v549, %v620
      %622 = vmatmul.bf16.gmra.mxu0 %v535
      %v623 = vpop.f32.mrf.mxu0
      %v624 = vadd.f32 %v549, %v623
      %v625 = vpop.f32.mrf.mxu0
      %v626 = vadd.f32 %v549, %v625
      %627 = vmatmul.bf16.gmra.mxu0 %v536
      %v628 = vpop.f32.mrf.mxu0
      %v629 = vadd.f32 %v549, %v628
      %v630 = vpop.f32.mrf.mxu0
      %v631 = vadd.f32 %v549, %v630
      %632 = vmatmul.bf16.gmra.mxu0 %v537
      %v633 = vpop.f32.mrf.mxu0
      %v634 = vadd.f32 %v549, %v633
      %v635 = vpop.f32.mrf.mxu0
      %v636 = vadd.f32 %v549, %v635
      %637 = vmatmul.bf16.gmra.mxu0 %v538
      %v638 = vpop.f32.mrf.mxu0
      %v639 = vadd.f32 %v549, %v638
      %v640 = vpop.f32.mrf.mxu0
      %v641 = vadd.f32 %v549, %v640
      %642 = vmatmul.bf16.gmra.mxu0 %v539
      %v643 = vpop.f32.mrf.mxu0
      %v644 = vadd.f32 %v549, %v643
      %v645 = vpop.f32.mrf.mxu0
      %v646 = vadd.f32 %v549, %v645
      %647 = vmatmul.bf16.gmra.mxu0 %v540
      %v648 = vpop.f32.mrf.mxu0
      %v649 = vadd.f32 %v549, %v648
      %v650 = vpop.f32.mrf.mxu0
      %v651 = vadd.f32 %v549, %v650
      %652 = vmatmul.bf16.gmra.mxu0 %v541
      %v653 = vpop.f32.mrf.mxu0
      %v654 = vadd.f32 %v549, %v653
      %v655 = vpop.f32.mrf.mxu0
      %v656 = vadd.f32 %v549, %v655
      %657 = vmatmul.bf16.gmra.mxu0 %v542
      %v658 = vpop.f32.mrf.mxu0
      %v659 = vadd.f32 %v549, %v658
      %v660 = vpop.f32.mrf.mxu0
      %v661 = vadd.f32 %v549, %v660
      %662 = vmatmul.bf16.gmra.mxu0 %v543
      %v663 = vpop.f32.mrf.mxu0
      %v664 = vadd.f32 %v549, %v663
      %v665 = vpop.f32.mrf.mxu0
      %v666 = vadd.f32 %v549, %v665
      %667 = vmatmul.bf16.gmra.mxu0 %v544
      %v668 = vpop.f32.mrf.mxu0
      %v669 = vadd.f32 %v549, %v668
      %v670 = vpop.f32.mrf.mxu0
      %v671 = vadd.f32 %v549, %v670
      %672 = vmatmul.bf16.gmra.mxu0 %v545
      %v673 = vpop.f32.mrf.mxu0
      %v674 = vadd.f32 %v549, %v673
      %v675 = vpop.f32.mrf.mxu0
      %v676 = vadd.f32 %v549, %v675
      %677 = vmatmul.bf16.gmra.mxu0 %v546
      %v678 = vpop.f32.mrf.mxu0
      %v679 = vadd.f32 %v549, %v678
      %v680 = vpop.f32.mrf.mxu0
      %v681 = vadd.f32 %v549, %v680
      %682 = vmatmul.bf16.gmra.mxu0 %v547
      %v683 = vpop.f32.mrf.mxu0
      %v684 = vadd.f32 %v549, %v683
      %v685 = vpop.f32.mrf.mxu0
      %v686 = vadd.f32 %v549, %v685
      %687 = vdwg.mxu0
      %v688 = vmax.f32 %v609, 0.0
      %v689 = vmax.f32 %v611, 0.0
      %v690 = vmax.f32 %v614, 0.0
      %v691 = vmax.f32 %v616, 0.0
      %v692 = vmax.f32 %v619, 0.0
      %v693 = vmax.f32 %v621, 0.0
      %v694 = vmax.f32 %v624, 0.0
      %v695 = vmax.f32 %v626, 0.0
      %v696 = vmax.f32 %v629, 0.0
      %v697 = vmax.f32 %v631, 0.0
      %v698 = vmax.f32 %v634, 0.0
      %v699 = vmax.f32 %v636, 0.0
      %v700 = vmax.f32 %v639, 0.0
      %v701 = vmax.f32 %v641, 0.0
      %v702 = vmax.f32 %v644, 0.0
      %v703 = vmax.f32 %v646, 0.0
      %v704 = vmax.f32 %v649, 0.0
      %v705 = vmax.f32 %v651, 0.0
      %v706 = vmax.f32 %v654, 0.0
      %v707 = vmax.f32 %v656, 0.0
      %v708 = vmax.f32 %v659, 0.0
      %v709 = vmax.f32 %v661, 0.0
      %v710 = vmax.f32 %v664, 0.0
      %v711 = vmax.f32 %v666, 0.0
      %v712 = vmax.f32 %v669, 0.0
      %v713 = vmax.f32 %v671, 0.0
      %v714 = vmax.f32 %v674, 0.0
      %v715 = vmax.f32 %v676, 0.0
      %v716 = vmax.f32 %v679, 0.0
      %v717 = vmax.f32 %v681, 0.0
      %v718 = vmax.f32 %v684, 0.0
      %v719 = vmax.f32 %v686, 0.0
      %v720 = vld [vmem:[%s5] sm:$0xf]
      %v721 = vld [vmem:[%s5 + $0x4] sm:$0xf]
      %v722 = vld [vmem:[%s5 + $0x8] sm:$0xf]
      %v723 = vld [vmem:[%s5 + $0xc] sm:$0xf]
      %v724 = vld [vmem:[%s5 + $0x10] sm:$0xf]
      %v725 = vld [vmem:[%s5 + $0x14] sm:$0xf]
      %v726 = vld [vmem:[%s5 + $0x18] sm:$0xf]
      %v727 = vld [vmem:[%s5 + $0x1c] sm:$0xf]
      %v728 = vld [vmem:[%s5 + $0x20] sm:$0xf]
      %v729 = vld [vmem:[%s5 + $0x24] sm:$0xf]
      %v730 = vld [vmem:[%s5 + $0x28] sm:$0xf]
      %v731 = vld [vmem:[%s5 + $0x2c] sm:$0xf]
      %v732 = vld [vmem:[%s5 + $0x30] sm:$0xf]
      %v733 = vld [vmem:[%s5 + $0x34] sm:$0xf]
      %v734 = vld [vmem:[%s5 + $0x38] sm:$0xf]
      %v735 = vld [vmem:[%s5 + $0x3c] sm:$0xf]
      %v736 = vld [vmem:[#allocation2] sm:$0x1]
      %v737 = vpack.c.bf16 %v689, %v688
      %v738 = vpack.c.bf16 %v691, %v690
      %v739 = vpack.c.bf16 %v693, %v692
      %v740 = vpack.c.bf16 %v695, %v694
      %v741 = vpack.c.bf16 %v697, %v696
      %v742 = vpack.c.bf16 %v699, %v698
      %v743 = vpack.c.bf16 %v701, %v700
      %v744 = vpack.c.bf16 %v703, %v702
      %v745 = vpack.c.bf16 %v705, %v704
      %v746 = vpack.c.bf16 %v707, %v706
      %v747 = vpack.c.bf16 %v709, %v708
      %v748 = vpack.c.bf16 %v711, %v710
      %v749 = vpack.c.bf16 %v713, %v712
      %v750 = vpack.c.bf16 %v715, %v714
      %v751 = vpack.c.bf16 %v717, %v716
      %v752 = vpack.c.bf16 %v719, %v718
      %v754 = vperm.slane %v736, 0
      %v772 = vunpack.c.l.b16 %v720
      %v773 = vunpack.c.l.b16 %v721
      %v774 = vunpack.c.l.b16 %v722
      %v775 = vunpack.c.l.b16 %v723
      %v776 = vunpack.c.l.b16 %v724
      %v777 = vunpack.c.l.b16 %v725
      %v778 = vunpack.c.l.b16 %v726
      %v779 = vunpack.c.l.b16 %v727
      %v780 = vunpack.c.l.b16 %v728
      %v781 = vunpack.c.l.b16 %v729
      %v782 = vunpack.c.l.b16 %v730
      %v783 = vunpack.c.l.b16 %v731
      %v784 = vunpack.c.l.b16 %v732
      %v785 = vunpack.c.l.b16 %v733
      %v786 = vunpack.c.l.b16 %v734
      %v787 = vunpack.c.l.b16 %v735
      %v788 = vpack.c.b16 %v773, %v772
      %v789 = vpack.c.b16 %v775, %v774
      %v790 = vpack.c.b16 %v777, %v776
      %v791 = vpack.c.b16 %v779, %v778
      %v792 = vpack.c.b16 %v781, %v780
      %v793 = vpack.c.b16 %v783, %v782
      %v794 = vpack.c.b16 %v785, %v784
      %v795 = vpack.c.b16 %v787, %v786
      %804 = vmatpush.bf16.msra.mxu0 %v795
      %805 = vmatpush.bf16.msra.mxu0 %v794
      %806 = vmatpush.bf16.msra.mxu0 %v793
      %807 = vmatpush.bf16.msra.mxu0 %v792
      %808 = vmatpush.bf16.msra.mxu0 %v791
      %809 = vmatpush.bf16.msra.mxu0 %v790
      %810 = vmatpush.bf16.msra.mxu0 %v789
      %811 = vmatpush.bf16.msra.mxu0 %v788
      %812 = vmatmul.bf16.gmra.mxu0 %v737
      %v813 = vpop.f32.mrf.mxu0
      %v814 = vadd.f32 %v754, %v813
      %v815 = vpop.f32.mrf.mxu0
      %v816 = vadd.f32 %v754, %v815
      %817 = vmatmul.bf16.gmra.mxu0 %v738
      %v818 = vpop.f32.mrf.mxu0
      %v819 = vadd.f32 %v754, %v818
      %v820 = vpop.f32.mrf.mxu0
      %v821 = vadd.f32 %v754, %v820
      %822 = vmatmul.bf16.gmra.mxu0 %v739
      %v823 = vpop.f32.mrf.mxu0
      %v824 = vadd.f32 %v754, %v823
      %v825 = vpop.f32.mrf.mxu0
      %v826 = vadd.f32 %v754, %v825
      %827 = vmatmul.bf16.gmra.mxu0 %v740
      %v828 = vpop.f32.mrf.mxu0
      %v829 = vadd.f32 %v754, %v828
      %v830 = vpop.f32.mrf.mxu0
      %v831 = vadd.f32 %v754, %v830
      %832 = vmatmul.bf16.gmra.mxu0 %v741
      %v833 = vpop.f32.mrf.mxu0
      %v834 = vadd.f32 %v754, %v833
      %v835 = vpop.f32.mrf.mxu0
      %v836 = vadd.f32 %v754, %v835
      %837 = vmatmul.bf16.gmra.mxu0 %v742
      %v838 = vpop.f32.mrf.mxu0
      %v839 = vadd.f32 %v754, %v838
      %v840 = vpop.f32.mrf.mxu0
      %v841 = vadd.f32 %v754, %v840
      %842 = vmatmul.bf16.gmra.mxu0 %v743
      %v843 = vpop.f32.mrf.mxu0
      %v844 = vadd.f32 %v754, %v843
      %v845 = vpop.f32.mrf.mxu0
      %v846 = vadd.f32 %v754, %v845
      %847 = vmatmul.bf16.gmra.mxu0 %v744
      %v848 = vpop.f32.mrf.mxu0
      %v849 = vadd.f32 %v754, %v848
      %v850 = vpop.f32.mrf.mxu0
      %v851 = vadd.f32 %v754, %v850
      %852 = vmatmul.bf16.gmra.mxu0 %v745
      %v853 = vpop.f32.mrf.mxu0
      %v854 = vadd.f32 %v754, %v853
      %v855 = vpop.f32.mrf.mxu0
      %v856 = vadd.f32 %v754, %v855
      %857 = vmatmul.bf16.gmra.mxu0 %v746
      %v858 = vpop.f32.mrf.mxu0
      %v859 = vadd.f32 %v754, %v858
      %v860 = vpop.f32.mrf.mxu0
      %v861 = vadd.f32 %v754, %v860
      %862 = vmatmul.bf16.gmra.mxu0 %v747
      %v863 = vpop.f32.mrf.mxu0
      %v864 = vadd.f32 %v754, %v863
      %v865 = vpop.f32.mrf.mxu0
      %v866 = vadd.f32 %v754, %v865
      %867 = vmatmul.bf16.gmra.mxu0 %v748
      %v868 = vpop.f32.mrf.mxu0
      %v869 = vadd.f32 %v754, %v868
      %v870 = vpop.f32.mrf.mxu0
      %v871 = vadd.f32 %v754, %v870
      %872 = vmatmul.bf16.gmra.mxu0 %v749
      %v873 = vpop.f32.mrf.mxu0
      %v874 = vadd.f32 %v754, %v873
      %v875 = vpop.f32.mrf.mxu0
      %v876 = vadd.f32 %v754, %v875
      %877 = vmatmul.bf16.gmra.mxu0 %v750
      %v878 = vpop.f32.mrf.mxu0
      %v879 = vadd.f32 %v754, %v878
      %v880 = vpop.f32.mrf.mxu0
      %v881 = vadd.f32 %v754, %v880
      %882 = vmatmul.bf16.gmra.mxu0 %v751
      %v883 = vpop.f32.mrf.mxu0
      %v884 = vadd.f32 %v754, %v883
      %v885 = vpop.f32.mrf.mxu0
      %v886 = vadd.f32 %v754, %v885
      %887 = vmatmul.bf16.gmra.mxu0 %v752
      %v888 = vpop.f32.mrf.mxu0
      %v889 = vadd.f32 %v754, %v888
      %v890 = vpop.f32.mrf.mxu0
      %v891 = vadd.f32 %v754, %v890
      %892 = vdwg.mxu0
      %vm893 = vcmask 7168
      %894 = vst.msk [vmem:[%s282] sm:$0xff] %vm893, %v814
      %895 = vst.msk [vmem:[%s282 + $0x8] sm:$0xff] %vm893, %v816
      %896 = vst.msk [vmem:[%s282 + $0x10] sm:$0xff] %vm893, %v819
      %897 = vst.msk [vmem:[%s282 + $0x18] sm:$0xff] %vm893, %v821
      %898 = vst.msk [vmem:[%s282 + $0x20] sm:$0xff] %vm893, %v824
      %899 = vst.msk [vmem:[%s282 + $0x28] sm:$0xff] %vm893, %v826
      %900 = vst.msk [vmem:[%s282 + $0x30] sm:$0xff] %vm893, %v829
      %901 = vst.msk [vmem:[%s282 + $0x38] sm:$0xff] %vm893, %v831
      %902 = vst.msk [vmem:[%s282 + $0x40] sm:$0xff] %vm893, %v834
      %903 = vst.msk [vmem:[%s282 + $0x48] sm:$0xff] %vm893, %v836
      %904 = vst.msk [vmem:[%s282 + $0x50] sm:$0xff] %vm893, %v839
      %905 = vst.msk [vmem:[%s282 + $0x58] sm:$0xff] %vm893, %v841
      %906 = vst.msk [vmem:[%s282 + $0x60] sm:$0xff] %vm893, %v844
      %907 = vst.msk [vmem:[%s282 + $0x68] sm:$0xff] %vm893, %v846
      %908 = vst.msk [vmem:[%s282 + $0x70] sm:$0xff] %vm893, %v849
      %909 = vst.msk [vmem:[%s282 + $0x78] sm:$0xff] %vm893, %v851
      %910 = vst.msk [vmem:[%s282 + $0x80] sm:$0xff] %vm893, %v854
      %911 = vst.msk [vmem:[%s282 + $0x88] sm:$0xff] %vm893, %v856
      %912 = vst.msk [vmem:[%s282 + $0x90] sm:$0xff] %vm893, %v859
      %913 = vst.msk [vmem:[%s282 + $0x98] sm:$0xff] %vm893, %v861
      %914 = vst.msk [vmem:[%s282 + $0xa0] sm:$0xff] %vm893, %v864
      %915 = vst.msk [vmem:[%s282 + $0xa8] sm:$0xff] %vm893, %v866
      %916 = vst.msk [vmem:[%s282 + $0xb0] sm:$0xff] %vm893, %v869
      %917 = vst.msk [vmem:[%s282 + $0xb8] sm:$0xff] %vm893, %v871
      %918 = vst.msk [vmem:[%s282 + $0xc0] sm:$0xff] %vm893, %v874
      %919 = vst.msk [vmem:[%s282 + $0xc8] sm:$0xff] %vm893, %v876
      %920 = vst.msk [vmem:[%s282 + $0xd0] sm:$0xff] %vm893, %v879
      %921 = vst.msk [vmem:[%s282 + $0xd8] sm:$0xff] %vm893, %v881
      %922 = vst.msk [vmem:[%s282 + $0xe0] sm:$0xff] %vm893, %v884
      %923 = vst.msk [vmem:[%s282 + $0xe8] sm:$0xff] %vm893, %v886
      %924 = vst.msk [vmem:[%s282 + $0xf0] sm:$0xff] %vm893, %v889
      %925 = vst.msk [vmem:[%s282 + $0xf8] sm:$0xff] %vm893, %v891
      %s926 = smul.u32 32, %s20
      %p927 = scmp.lt.s32.totalorder %s926, 63
      %s928 = scalar_select %p927, %s926, 63
      %s929 = smul.addr %s928, 8
      %s930 = scalar_lea.vmem %s7, %s929
      // Predicated region
      $region49: #{neural_network_forward.1} parent=47 // pred_check
        %p931 = pneg %p190
      $region50: #{neural_network_forward.1} parent=47 // pred_check_branch
        %933 = sbr.rel (%p931) target = $region52
      $region51: #{neural_network_forward.1} parent=47 // pred_region
        %s934 = smul.u32 32, %s20
      $region52: #{neural_network_forward.1} parent=47 // pred_fallthru
        _
    $region48: #{neural_network_forward.1} parent=5 // pred_fallthru
      _
    %p935 = scmp.le.s32.totalorder 2, %s15
    // Predicated region
    $region53: #{neural_network_forward.1} parent=5 // pred_check
      %p936 = pneg %p935
    $region54: #{neural_network_forward.1} parent=5 // pred_check_branch
      %938 = sbr.rel (%p936) target = $region56
    $region55: #{neural_network_forward.1} parent=5 // pred_region
      %s939 = ssub.s32 %s15, 2
      // Predicated region
      $region57: #{neural_network_forward.1} parent=55 // pred_check
        %p940 = pneg %p196
      $region58: #{neural_network_forward.1} parent=55 // pred_check_branch
        %942 = sbr.rel (%p940) target = $region60
      $region59: #{neural_network_forward.1} parent=55 // pred_region
        %s943 = smul.u32 32, %s21
        %p944 = scmp.lt.s32.totalorder %s943, 63
        %s945 = scalar_select %p944, %s943, 63
        %s946 = smul.addr %s945, 8
        %s947 = scalar_lea.vmem %s7, %s946
      $region60: #{neural_network_forward.1} parent=55 // pred_fallthru
        _
    $region56: #{neural_network_forward.1} parent=5 // pred_fallthru
      _
  $region6: #{neural_network_forward.1} parent=0 // loop_footer
    %s19 = sadd.s32 1, %s15
  $region7: #{neural_network_forward.1} parent=0 // loop_footer_branch
    %14 = sbr.rel target = $region3
  $region8: #{neural_network_forward.1} parent=0 // loop_exit
    _

</llo_original>
